<compile_context>
chip_gen: v7x
topology: tpu7x:2x2x1
jax: 0.10.0
libtpu: 0.0.40
codegen_flags: <defaults>
</compile_context>

<pallas_src>
import functools

import jax
import jax.numpy as jnp
from jax.experimental import pallas as pl
from jax.experimental.pallas import tpu as pltpu


def _round_up(x, m):
    return ((x + m - 1) // m) * m


def _sublane_multiple(dtype):
    # Channel slices must land on packed-row boundaries:
    # 4-byte dtypes -> 8 rows, 2-byte -> 16, 1-byte -> 32.
    return {4: 8, 2: 16, 1: 32}.get(jnp.dtype(dtype).itemsize, 8)


def _vmem_cap_bytes():
    # Physical VMEM on the current chip (128 MiB on v5e/v6e, 64 MiB/TC on v7x);
    # conservative fallback if the query is unavailable.
    try:
        return int(pltpu.get_tpu_info().vmem_capacity_bytes)
    except Exception:
        return 64 << 20


def _fuser_cross_kernel(ls_ref, lv_ref, rs_ref, rv_ref, s_out_ref, v_out_ref,
                        *, S, V):
    # ls_ref/rs_ref : (S, TN)      scalar tiles (channels on sublanes)
    # lv_ref/rv_ref : (3V, TN)     vector tiles (row = component*V + channel)
    # s_out_ref     : (S+V, TN)    rows 0:S = ls*rs, rows S:S+V = <lv, rv>
    # v_out_ref     : (6V, TN)     rows 0:3V = (lv+rv)/2, rows 3V:6V = cross
    s_dt = s_out_ref.dtype
    v_dt = v_out_ref.dtype

    # ---- scalar product -----------------------------------------------------
    s_out_ref[:S, :] = (ls_ref[...] * rs_ref[...]).astype(s_dt)

    # ---- per-component vector slices (no full-block temporaries) ------------
    lx, ly, lz = lv_ref[0:V, :], lv_ref[V:2 * V, :], lv_ref[2 * V:3 * V, :]
    rx, ry, rz = rv_ref[0:V, :], rv_ref[V:2 * V, :], rv_ref[2 * V:3 * V, :]

    # channel-wise dot over 3 components: whole-vreg VPU multiply-adds
    s_out_ref[S:S + V, :] = (lx * rx + ly * ry + lz * rz).astype(s_dt)

    # average -> rows [0, 3V)
    v_out_ref[0 * V:1 * V, :] = ((lx + rx) * 0.5).astype(v_dt)
    v_out_ref[1 * V:2 * V, :] = ((ly + ry) * 0.5).astype(v_dt)
    v_out_ref[2 * V:3 * V, :] = ((lz + rz) * 0.5).astype(v_dt)

    # cross product in float32 (matches torch); per-slice casts keep live VMEM low
    f32 = jnp.float32
    lxf, lyf, lzf = lx.astype(f32), ly.astype(f32), lz.astype(f32)
    rxf, ryf, rzf = rx.astype(f32), ry.astype(f32), rz.astype(f32)
    v_out_ref[3 * V:4 * V, :] = (lyf * rzf - lzf * ryf).astype(v_dt)
    v_out_ref[4 * V:5 * V, :] = (lzf * rxf - lxf * rzf).astype(v_dt)
    v_out_ref[5 * V:6 * V, :] = (lxf * ryf - lyf * rxf).astype(v_dt)


def _fuser_cross_padded(ls_k, lv_k, rs_k, rv_k, *, S, V, tn):
    """Run the kernel on channels-major, lane-padded inputs. Returns kernel-layout outputs."""
    n_pad = ls_k.shape[1]
    grid = (n_pad // tn,)

    # dtype-correct VMEM footprint (double-buffered per array + headroom),
    # capped at 3/4 of physical VMEM (<=48 MiB on v7x, <=96 MiB on v5e/v6e).
    s_elt = jnp.dtype(ls_k.dtype).itemsize
    v_elt = jnp.dtype(lv_k.dtype).itemsize
    block_bytes = tn * (2 * S * s_elt + 6 * V * v_elt        # inputs
                        + (S + V) * s_elt + 6 * V * v_elt)   # outputs
    vmem_limit = int(min(max(3 * block_bytes + (4 << 20), 16 << 20),
                         (_vmem_cap_bytes() * 3) // 4))

    kernel = functools.partial(_fuser_cross_kernel, S=S, V=V)
    return pl.pallas_call(
        kernel,
        out_shape=(
            jax.ShapeDtypeStruct((S + V, n_pad), ls_k.dtype),
            jax.ShapeDtypeStruct((6 * V, n_pad), lv_k.dtype),
        ),
        grid_spec=pltpu.PrefetchScalarGridSpec(
            num_scalar_prefetch=0,
            grid=grid,
            in_specs=[
                pl.BlockSpec((S, tn), lambda i: (0, i)),
                pl.BlockSpec((3 * V, tn), lambda i: (0, i)),
                pl.BlockSpec((S, tn), lambda i: (0, i)),
                pl.BlockSpec((3 * V, tn), lambda i: (0, i)),
            ],
            out_specs=(
                pl.BlockSpec((S + V, tn), lambda i: (0, i)),
                pl.BlockSpec((6 * V, tn), lambda i: (0, i)),
            ),
        ),
        compiler_params=pltpu.CompilerParams(
            dimension_semantics=("parallel",),
            vmem_limit_bytes=vmem_limit,
        ),
    )(ls_k, lv_k, rs_k, rv_k)


def _to_channels_major(s, v):
    """[M, S] -> [S, M];  [M, V, 3] -> [3V, M] (row = component*V + channel)."""
    M = s.shape[0]
    V = v.shape[1]
    return s.T, jnp.transpose(v, (2, 1, 0)).reshape(3 * V, M)


def _gather_or_pad(s_k, v_k, index, n_pad):
    """Gather columns by `index` (padding folded into the index), or pad columns."""
    if index is not None:
        pad = n_pad - index.shape[0]
        idx = jnp.pad(index, (0, pad)) if pad else index
        return jnp.take(s_k, idx, axis=1), jnp.take(v_k, idx, axis=1)
    pad = n_pad - s_k.shape[1]
    if pad:
        s_k = jnp.pad(s_k, ((0, 0), (0, pad)))
        v_k = jnp.pad(v_k, ((0, 0), (0, pad)))
    return s_k, v_k


@functools.partial(jax.jit,
                   static_argnames=("type_", "tile_n", "channels_major_out"))
def fuser_forward(left, right, left_index=None, right_index=None, *,
                  type_="cross", tile_n=8192, channels_major_out=False):
    """Pallas implementation of Fuser.forward (type_='cross').

    left / right: tuples (scalar [M, S], vector [M, V, 3]) in PyTorch layout.
    Default output is PyTorch layout (scalar [N, S+V], vector [N, 2V, 3]).
    With channels_major_out=True returns kernel layout (scalar [S+V, N],
    vector [6V, N]; rows 0:3V = avg, 3V:6V = cross, row = comp*V + chan) and
    skips the back-transpose entirely.
    """
    if type_ != "cross":
        # TODO(synk): 'concat' fuse type is a pure memory concat; only 'cross'
        # is kernelized.
        raise NotImplementedError("Only 'cross' Fuser type is kernelized")

    ls, lv = left
    rs, rv = right
    S = ls.shape[-1]
    V = lv.shape[-2]
    assert rs.shape[-1] == S and rv.shape[-2] == V
    assert S % _sublane_multiple(ls.dtype) == 0, "S must be sublane aligned"
    assert V % _sublane_multiple(lv.dtype) == 0, "V must be sublane aligned"

    # number of fused rows (edges)
    if left_index is not None:
        N = left_index.shape[0]
    elif right_index is not None:
        N = right_index.shape[0]
    else:
        N = ls.shape[0]

    # ---- tile / padding choices (static) ------------------------------------
    n128 = _round_up(max(N, 1), 128)
    tn_cap = _round_up(max(int(tile_n), 128), 128)
    # force >=2 grid steps whenever N allows it so both v7x TensorCores get work
    half = _round_up(pl.cdiv(n128, 2), 128)
    tn = max(128, min(tn_cap, half, n128))
    n_pad = _round_up(n128, tn)

    # ---- to kernel layout: transpose the (small) source arrays once, then
    # gather columns with the node-axis padding folded into the index --------
    ls_k, lv_k = _to_channels_major(ls, lv)
    rs_k, rv_k = _to_channels_major(rs, rv)
    ls_k, lv_k = _gather_or_pad(ls_k, lv_k, left_index, n_pad)
    rs_k, rv_k = _gather_or_pad(rs_k, rv_k, right_index, n_pad)

    s_out_k, v_out_k = _fuser_cross_padded(ls_k, lv_k, rs_k, rv_k,
                                           S=S, V=V, tn=tn)

    if channels_major_out:
        return s_out_k[:, :N], v_out_k[:, :N]

    # ---- back to torch layout ------------------------------------------------
    s_out = s_out_k[:, :N].T                                 # [N, S+V]
    v_out = (v_out_k[:, :N]
             .reshape(2, 3, V, N)                            # (avg/cross, comp, chan, node)
             .transpose(3, 0, 2, 1)                          # (node, avg/cross, chan, comp)
             .reshape(N, 2 * V, 3))                          # [N, 2V, 3]
    return s_out, v_out


def _reference(left, right, left_index=None, right_index=None):
    ls, lv = left
    rs, rv = right
    if left_index is not None:
        ls, lv = ls[left_index], lv[left_index]
    if right_index is not None:
        rs, rv = rs[right_index], rv[right_index]
    scalar = jnp.concatenate([ls * rs, jnp.sum(lv * rv, axis=-1)], axis=-1)
    vector = jnp.concatenate(
        [(lv + rv) / 2,
         jnp.cross(lv.astype(jnp.float32),
                   rv.astype(jnp.float32)).astype(lv.dtype)],
        axis=-2,
    )
    return scalar, vector


if __name__ == "__main__":
    key = jax.random.PRNGKey(0)
    k1, k2, k3, k4, k5, k6 = jax.random.split(key, 6)

    M = 160   # source nodes (before index gather)
    E = 300   # gathered rows / edges (NOT a multiple of 128 -> exercises padding)
    S = 32    # scalar channels
    V = 16    # vector channels

    left = (
        jax.random.normal(k1, (M, S), dtype=jnp.float32),
        jax.random.normal(k2, (M, V, 3), dtype=jnp.float32),
    )
    right = (
        jax.random.normal(k3, (M, S), dtype=jnp.float32),
        jax.random.normal(k4, (M, V, 3), dtype=jnp.float32),
    )
    left_index = jax.random.randint(k5, (E,), 0, M)
    right_index = jax.random.randint(k6, (E,), 0, M)

    s_ref, v_ref = _reference(left, right, left_index, right_index)

    # Small explicit tile -> multi-step grid + padded tail folded into the gather.
    s_out, v_out = fuser_forward(left, right, left_index, right_index,
                                 type_="cross", tile_n=128)
    jax.block_until_ready((s_out, v_out))
    assert s_out.shape == (E, S + V) and v_out.shape == (E, 2 * V, 3)
    assert jnp.allclose(s_out, s_ref, atol=1e-5, rtol=1e-5)
    assert jnp.allclose(v_out, v_ref, atol=1e-5, rtol=1e-5)

    # Production default tile (auto-capped so the grid still has >=2 steps).
    s_out2, v_out2 = fuser_forward(left, right, left_index, right_index,
                                   type_="cross")
    jax.block_until_ready((s_out2, v_out2))
    assert jnp.allclose(s_out2, s_ref, atol=1e-5, rtol=1e-5)
    assert jnp.allclose(v_out2, v_ref, atol=1e-5, rtol=1e-5)

    # Channels-major output path (no back-transpose); re-layout here only to verify.
    s_cm, v_cm = fuser_forward(left, right, left_index, right_index,
                               type_="cross", tile_n=128, channels_major_out=True)
    jax.block_until_ready((s_cm, v_cm))
    s_cm_t = s_cm.T
    v_cm_t = (v_cm.reshape(2, 3, V, E).transpose(3, 0, 2, 1).reshape(E, 2 * V, 3))
    assert jnp.allclose(s_cm_t, s_ref, atol=1e-5, rtol=1e-5)
    assert jnp.allclose(v_cm_t, v_ref, atol=1e-5, rtol=1e-5)

    print("KERNEL_OK")
</pallas_src>

<mosaic_0001>
module attributes {stable_mosaic.version = 11 : i64} {
  func.func @_fuser_cross_kernel(%arg0: i32, %arg1: memref<32x128xf32, #tpu.memory_space<vmem>>, %arg2: memref<48x128xf32, #tpu.memory_space<vmem>>, %arg3: memref<32x128xf32, #tpu.memory_space<vmem>>, %arg4: memref<48x128xf32, #tpu.memory_space<vmem>>, %arg5: memref<48x128xf32, #tpu.memory_space<vmem>>, %arg6: memref<96x128xf32, #tpu.memory_space<vmem>>) attributes {dimension_semantics = [#tpu.dimension_semantics<parallel>], iteration_bounds = array<i64: 3>, scalar_prefetch = 0 : i64, scratch_operands = 0 : i64, tpu.core_type = #tpu.core_type<tc>, window_params = [{transform_indices = @transform_0, window_bounds = array<i64: 32, 128>}, {transform_indices = @transform_1, window_bounds = array<i64: 48, 128>}, {transform_indices = @transform_2, window_bounds = array<i64: 32, 128>}, {transform_indices = @transform_3, window_bounds = array<i64: 48, 128>}, {transform_indices = @transform_4, window_bounds = array<i64: 48, 128>}, {transform_indices = @transform_5, window_bounds = array<i64: 96, 128>}]} {
    %c0 = arith.constant 0 : index
    %c0_0 = arith.constant 0 : index
    %0 = vector.load %arg1[%c0, %c0_0] : memref<32x128xf32, #tpu.memory_space<vmem>>, vector<32x128xf32>
    %c0_1 = arith.constant 0 : index
    %c0_2 = arith.constant 0 : index
    %1 = vector.load %arg3[%c0_1, %c0_2] : memref<32x128xf32, #tpu.memory_space<vmem>>, vector<32x128xf32>
    %2 = arith.mulf %0, %1 : vector<32x128xf32>
    %c0_3 = arith.constant 0 : index
    %c0_4 = arith.constant 0 : index
    %3 = vector.load %arg5[%c0_3, %c0_4] : memref<48x128xf32, #tpu.memory_space<vmem>>, vector<32x128xf32>
    tpu.vector_store %arg5[%c0_3, %c0_4], %2 {strides = array<i32>} : memref<48x128xf32, #tpu.memory_space<vmem>>, vector<32x128xf32>,
    %c0_5 = arith.constant 0 : index
    %c0_6 = arith.constant 0 : index
    %4 = vector.load %arg2[%c0_5, %c0_6] : memref<48x128xf32, #tpu.memory_space<vmem>>, vector<16x128xf32>
    %c16 = arith.constant 16 : index
    %c0_7 = arith.constant 0 : index
    %5 = vector.load %arg2[%c16, %c0_7] : memref<48x128xf32, #tpu.memory_space<vmem>>, vector<16x128xf32>
    %c32 = arith.constant 32 : index
    %c0_8 = arith.constant 0 : index
    %6 = vector.load %arg2[%c32, %c0_8] : memref<48x128xf32, #tpu.memory_space<vmem>>, vector<16x128xf32>
    %c0_9 = arith.constant 0 : index
    %c0_10 = arith.constant 0 : index
    %7 = vector.load %arg4[%c0_9, %c0_10] : memref<48x128xf32, #tpu.memory_space<vmem>>, vector<16x128xf32>
    %c16_11 = arith.constant 16 : index
    %c0_12 = arith.constant 0 : index
    %8 = vector.load %arg4[%c16_11, %c0_12] : memref<48x128xf32, #tpu.memory_space<vmem>>, vector<16x128xf32>
    %c32_13 = arith.constant 32 : index
    %c0_14 = arith.constant 0 : index
    %9 = vector.load %arg4[%c32_13, %c0_14] : memref<48x128xf32, #tpu.memory_space<vmem>>, vector<16x128xf32>
    %10 = arith.mulf %4, %7 : vector<16x128xf32>
    %11 = arith.mulf %5, %8 : vector<16x128xf32>
    %12 = arith.addf %10, %11 : vector<16x128xf32>
    %13 = arith.mulf %6, %9 : vector<16x128xf32>
    %14 = arith.addf %12, %13 : vector<16x128xf32>
    %c32_15 = arith.constant 32 : index
    %c0_16 = arith.constant 0 : index
    %15 = vector.load %arg5[%c32_15, %c0_16] : memref<48x128xf32, #tpu.memory_space<vmem>>, vector<16x128xf32>
    tpu.vector_store %arg5[%c32_15, %c0_16], %14 {strides = array<i32>} : memref<48x128xf32, #tpu.memory_space<vmem>>, vector<16x128xf32>,
    %16 = arith.addf %4, %7 : vector<16x128xf32>
    %cst = arith.constant 5.000000e-01 : f32
    %17 = vector.broadcast %cst : f32 to vector<16x128xf32>
    %18 = arith.mulf %16, %17 : vector<16x128xf32>
    %c0_17 = arith.constant 0 : index
    %c0_18 = arith.constant 0 : index
    %19 = vector.load %arg6[%c0_17, %c0_18] : memref<96x128xf32, #tpu.memory_space<vmem>>, vector<16x128xf32>
    tpu.vector_store %arg6[%c0_17, %c0_18], %18 {strides = array<i32>} : memref<96x128xf32, #tpu.memory_space<vmem>>, vector<16x128xf32>,
    %20 = arith.addf %5, %8 : vector<16x128xf32>
    %cst_19 = arith.constant 5.000000e-01 : f32
    %21 = vector.broadcast %cst_19 : f32 to vector<16x128xf32>
    %22 = arith.mulf %20, %21 : vector<16x128xf32>
    %c16_20 = arith.constant 16 : index
    %c0_21 = arith.constant 0 : index
    %23 = vector.load %arg6[%c16_20, %c0_21] : memref<96x128xf32, #tpu.memory_space<vmem>>, vector<16x128xf32>
    tpu.vector_store %arg6[%c16_20, %c0_21], %22 {strides = array<i32>} : memref<96x128xf32, #tpu.memory_space<vmem>>, vector<16x128xf32>,
    %24 = arith.addf %6, %9 : vector<16x128xf32>
    %cst_22 = arith.constant 5.000000e-01 : f32
    %25 = vector.broadcast %cst_22 : f32 to vector<16x128xf32>
    %26 = arith.mulf %24, %25 : vector<16x128xf32>
    %c32_23 = arith.constant 32 : index
    %c0_24 = arith.constant 0 : index
    %27 = vector.load %arg6[%c32_23, %c0_24] : memref<96x128xf32, #tpu.memory_space<vmem>>, vector<16x128xf32>
    tpu.vector_store %arg6[%c32_23, %c0_24], %26 {strides = array<i32>} : memref<96x128xf32, #tpu.memory_space<vmem>>, vector<16x128xf32>,
    %28 = arith.mulf %5, %9 : vector<16x128xf32>
    %29 = arith.mulf %6, %8 : vector<16x128xf32>
    %30 = arith.subf %28, %29 : vector<16x128xf32>
    %c48 = arith.constant 48 : index
    %c0_25 = arith.constant 0 : index
    %31 = vector.load %arg6[%c48, %c0_25] : memref<96x128xf32, #tpu.memory_space<vmem>>, vector<16x128xf32>
    tpu.vector_store %arg6[%c48, %c0_25], %30 {strides = array<i32>} : memref<96x128xf32, #tpu.memory_space<vmem>>, vector<16x128xf32>,
    %32 = arith.mulf %6, %7 : vector<16x128xf32>
    %33 = arith.mulf %4, %9 : vector<16x128xf32>
    %34 = arith.subf %32, %33 : vector<16x128xf32>
    %c64 = arith.constant 64 : index
    %c0_26 = arith.constant 0 : index
    %35 = vector.load %arg6[%c64, %c0_26] : memref<96x128xf32, #tpu.memory_space<vmem>>, vector<16x128xf32>
    tpu.vector_store %arg6[%c64, %c0_26], %34 {strides = array<i32>} : memref<96x128xf32, #tpu.memory_space<vmem>>, vector<16x128xf32>,
    %36 = arith.mulf %4, %8 : vector<16x128xf32>
    %37 = arith.mulf %5, %7 : vector<16x128xf32>
    %38 = arith.subf %36, %37 : vector<16x128xf32>
    %c80 = arith.constant 80 : index
    %c0_27 = arith.constant 0 : index
    %39 = vector.load %arg6[%c80, %c0_27] : memref<96x128xf32, #tpu.memory_space<vmem>>, vector<16x128xf32>
    tpu.vector_store %arg6[%c80, %c0_27], %38 {strides = array<i32>} : memref<96x128xf32, #tpu.memory_space<vmem>>, vector<16x128xf32>,
    return
  }
  func.func @transform_0(%arg0: i32) -> (i32, i32) {
    %c0_i32 = arith.constant 0 : i32
    %c0_i32_0 = arith.constant 0 : i32
    return %c0_i32, %arg0 : i32, i32
  }
  func.func @transform_1(%arg0: i32) -> (i32, i32) {
    %c0_i32 = arith.constant 0 : i32
    %c0_i32_0 = arith.constant 0 : i32
    return %c0_i32, %arg0 : i32, i32
  }
  func.func @transform_2(%arg0: i32) -> (i32, i32) {
    %c0_i32 = arith.constant 0 : i32
    %c0_i32_0 = arith.constant 0 : i32
    return %c0_i32, %arg0 : i32, i32
  }
  func.func @transform_3(%arg0: i32) -> (i32, i32) {
    %c0_i32 = arith.constant 0 : i32
    %c0_i32_0 = arith.constant 0 : i32
    return %c0_i32, %arg0 : i32, i32
  }
  func.func @transform_4(%arg0: i32) -> (i32, i32) {
    %c0_i32 = arith.constant 0 : i32
    %c0_i32_0 = arith.constant 0 : i32
    return %c0_i32, %arg0 : i32, i32
  }
  func.func @transform_5(%arg0: i32) -> (i32, i32) {
    %c0_i32 = arith.constant 0 : i32
    %c0_i32_0 = arith.constant 0 : i32
    return %c0_i32, %arg0 : i32, i32
  }
}

</mosaic_0001>

<llo_original>
// kernel: fuser_forward.1
$region0: #{fuser_forward.1}
  #allocation0 [shape = 'u32[]', space=smem, size = 0x4, offset = 0x4, fixed_abs, tag = 'smem constant byte address 0x4 - core index']
  #allocation1 [shape = 'u32[144,128]{1,0:T(1,128)}', space=vmem, size = 0x12000, scoped, tag = 'internal scratch']
  %s0 = inlined_call_operand.vmem [shape: f32[32,384], index: 0, kind: input, shape index: {}]
  %s1 = inlined_call_operand.vmem [shape: f32[48,384], index: 1, kind: input, shape index: {}]
  %s2 = inlined_call_operand.vmem [shape: f32[32,384], index: 2, kind: input, shape index: {}]
  %s3 = inlined_call_operand.vmem [shape: f32[48,384], index: 3, kind: input, shape index: {}]
  %s4 = inlined_call_operand.vmem [shape: f32[48,384], index: 4, kind: output, shape index: {0}]
  %s5 = inlined_call_operand.vmem [shape: f32[96,384], index: 5, kind: output, shape index: {1}]
  %6 = xla_tuple %s4, %s5
  %s7 = sld [smem:[#allocation0]]
  $region277: #{fuser_forward.1} parent=0
    _
  %s9 = ssub.s32 1, %s7
  %s10 = scalar_select 0, %s9, %s7
  $region1: #{fuser_forward.1} parent=0
    #allocation2 [shape = 'u8[32768]{0}', space=vmem, size = 0x8000, scoped, tag = 'input window, operand 0']
    #allocation3 [shape = 'u8[49152]{0}', space=vmem, size = 0xc000, scoped, tag = 'input window, operand 1']
    #allocation4 [shape = 'u8[32768]{0}', space=vmem, size = 0x8000, scoped, tag = 'input window, operand 2']
    #allocation5 [shape = 'u8[49152]{0}', space=vmem, size = 0xc000, scoped, tag = 'input window, operand 3']
    #allocation6 [shape = 'u8[49152]{0}', space=vmem, size = 0xc000, scoped, tag = 'output window, operand 0']
    #allocation7 [shape = 'u8[98304]{0}', space=vmem, size = 0x18000, scoped, tag = 'output window, operand 1']
    loop: start=0, step=1, limit=5
    $region2: #{fuser_forward.1} parent=1 // loop_pre_header
      _
    $region3: #{fuser_forward.1} parent=1 // loop_header
      %s12 = sphi 0, %s16
      %p13 = scmp.ge.s32.totalorder %s12, 5
      %s22 = sphi 0, %s24
      %s25 = sphi 0, %s22
      %s26 = sphi 0, %s25
      %s42 = sphi 0, %s26
      %s48 = sphi 0, %s50
      %s51 = sphi 0, %s48
      %s52 = sphi 0, %s51
      %s68 = sphi 0, %s52
      %s74 = sphi 0, %s76
      %s77 = sphi 0, %s74
      %s78 = sphi 0, %s77
      %s94 = sphi 0, %s78
      %s100 = sphi 0, %s102
      %s103 = sphi 0, %s100
      %s104 = sphi 0, %s103
      %s120 = sphi 0, %s104
      %s126 = sphi 0, %s128
      %s129 = sphi 0, %s126
      %s130 = sphi 0, %s129
      %s146 = sphi 0, %s130
      %s152 = sphi 0, %s154
      %s155 = sphi 0, %s152
      %s156 = sphi 0, %s155
      %s172 = sphi 0, %s156
    $region4: #{fuser_forward.1} parent=1 // loop_header_branch
      %15 = sbr.rel (%p13) target = $region8
    $region5: #{fuser_forward.1} parent=1 // loop_body
      %s17 = ssub.s32 %s12, 1
      %s18 = ssub.s32 %s12, 2
      %s19 = sadd.s32 %s12, 1
      %s20 = ssub.s32 %s12, %s19
      %p21 = scmp.eq.s32.totalorder %s20, 0
      %s23 = sadd.s32 %s22, 1
      %s24 = scalar_select %p21, %s22, %s23
      %p27 = pneg %p21
      %p28 = scmp.eq.s32.totalorder %s12, 2
      %p29 = por %p27, %p28
      %p30 = scmp.ne.s32.totalorder %s22, %s25
      %p31 = scmp.eq.s32.totalorder %s12, 0
      %p32 = por %p30, %p31
      %p33 = scmp.ne.s32.totalorder %s22, %s25
      %p34 = scmp.eq.s32.totalorder %s17, 2
      %p35 = por %p33, %p34
      %p36 = scmp.ne.s32.totalorder %s25, %s26
      %p37 = scmp.eq.s32.totalorder %s17, 0
      %p38 = por %p36, %p37
      %p39 = scmp.ne.s32.totalorder %s25, %s26
      %p40 = scmp.eq.s32.totalorder %s18, 2
      %p41 = por %p39, %p40
      %p43 = scmp.ne.s32.totalorder %s26, %s42
      %p44 = scmp.eq.s32.totalorder %s18, 0
      %p45 = por %p43, %p44
      %s46 = ssub.s32 %s12, %s19
      %p47 = scmp.eq.s32.totalorder %s46, 0
      %s49 = sadd.s32 %s48, 1
      %s50 = scalar_select %p47, %s48, %s49
      %p53 = pneg %p47
      %p54 = scmp.eq.s32.totalorder %s12, 2
      %p55 = por %p53, %p54
      %p56 = scmp.ne.s32.totalorder %s48, %s51
      %p57 = scmp.eq.s32.totalorder %s12, 0
      %p58 = por %p56, %p57
      %p59 = scmp.ne.s32.totalorder %s48, %s51
      %p60 = scmp.eq.s32.totalorder %s17, 2
      %p61 = por %p59, %p60
      %p62 = scmp.ne.s32.totalorder %s51, %s52
      %p63 = scmp.eq.s32.totalorder %s17, 0
      %p64 = por %p62, %p63
      %p65 = scmp.ne.s32.totalorder %s51, %s52
      %p66 = scmp.eq.s32.totalorder %s18, 2
      %p67 = por %p65, %p66
      %p69 = scmp.ne.s32.totalorder %s52, %s68
      %p70 = scmp.eq.s32.totalorder %s18, 0
      %p71 = por %p69, %p70
      %s72 = ssub.s32 %s12, %s19
      %p73 = scmp.eq.s32.totalorder %s72, 0
      %s75 = sadd.s32 %s74, 1
      %s76 = scalar_select %p73, %s74, %s75
      %p79 = pneg %p73
      %p80 = scmp.eq.s32.totalorder %s12, 2
      %p81 = por %p79, %p80
      %p82 = scmp.ne.s32.totalorder %s74, %s77
      %p83 = scmp.eq.s32.totalorder %s12, 0
      %p84 = por %p82, %p83
      %p85 = scmp.ne.s32.totalorder %s74, %s77
      %p86 = scmp.eq.s32.totalorder %s17, 2
      %p87 = por %p85, %p86
      %p88 = scmp.ne.s32.totalorder %s77, %s78
      %p89 = scmp.eq.s32.totalorder %s17, 0
      %p90 = por %p88, %p89
      %p91 = scmp.ne.s32.totalorder %s77, %s78
      %p92 = scmp.eq.s32.totalorder %s18, 2
      %p93 = por %p91, %p92
      %p95 = scmp.ne.s32.totalorder %s78, %s94
      %p96 = scmp.eq.s32.totalorder %s18, 0
      %p97 = por %p95, %p96
      %s98 = ssub.s32 %s12, %s19
      %p99 = scmp.eq.s32.totalorder %s98, 0
      %s101 = sadd.s32 %s100, 1
      %s102 = scalar_select %p99, %s100, %s101
      %p105 = pneg %p99
      %p106 = scmp.eq.s32.totalorder %s12, 2
      %p107 = por %p105, %p106
      %p108 = scmp.ne.s32.totalorder %s100, %s103
      %p109 = scmp.eq.s32.totalorder %s12, 0
      %p110 = por %p108, %p109
      %p111 = scmp.ne.s32.totalorder %s100, %s103
      %p112 = scmp.eq.s32.totalorder %s17, 2
      %p113 = por %p111, %p112
      %p114 = scmp.ne.s32.totalorder %s103, %s104
      %p115 = scmp.eq.s32.totalorder %s17, 0
      %p116 = por %p114, %p115
      %p117 = scmp.ne.s32.totalorder %s103, %s104
      %p118 = scmp.eq.s32.totalorder %s18, 2
      %p119 = por %p117, %p118
      %p121 = scmp.ne.s32.totalorder %s104, %s120
      %p122 = scmp.eq.s32.totalorder %s18, 0
      %p123 = por %p121, %p122
      %s124 = ssub.s32 %s12, %s19
      %p125 = scmp.eq.s32.totalorder %s124, 0
      %s127 = sadd.s32 %s126, 1
      %s128 = scalar_select %p125, %s126, %s127
      %p131 = pneg %p125
      %p132 = scmp.eq.s32.totalorder %s12, 2
      %p133 = por %p131, %p132
      %p134 = scmp.ne.s32.totalorder %s126, %s129
      %p135 = scmp.eq.s32.totalorder %s12, 0
      %p136 = por %p134, %p135
      %p137 = scmp.ne.s32.totalorder %s126, %s129
      %p138 = scmp.eq.s32.totalorder %s17, 2
      %p139 = por %p137, %p138
      %p140 = scmp.ne.s32.totalorder %s129, %s130
      %p141 = scmp.eq.s32.totalorder %s17, 0
      %p142 = por %p140, %p141
      %p143 = scmp.ne.s32.totalorder %s129, %s130
      %p144 = scmp.eq.s32.totalorder %s18, 2
      %p145 = por %p143, %p144
      %p147 = scmp.ne.s32.totalorder %s130, %s146
      %p148 = scmp.eq.s32.totalorder %s18, 0
      %p149 = por %p147, %p148
      %s150 = ssub.s32 %s12, %s19
      %p151 = scmp.eq.s32.totalorder %s150, 0
      %s153 = sadd.s32 %s152, 1
      %s154 = scalar_select %p151, %s152, %s153
      %p157 = pneg %p151
      %p158 = scmp.eq.s32.totalorder %s12, 2
      %p159 = por %p157, %p158
      %p160 = scmp.ne.s32.totalorder %s152, %s155
      %p161 = scmp.eq.s32.totalorder %s12, 0
      %p162 = por %p160, %p161
      %p163 = scmp.ne.s32.totalorder %s152, %s155
      %p164 = scmp.eq.s32.totalorder %s17, 2
      %p165 = por %p163, %p164
      %p166 = scmp.ne.s32.totalorder %s155, %s156
      %p167 = scmp.eq.s32.totalorder %s17, 0
      %p168 = por %p166, %p167
      %p169 = scmp.ne.s32.totalorder %s155, %s156
      %p170 = scmp.eq.s32.totalorder %s18, 2
      %p171 = por %p169, %p170
      %p173 = scmp.ne.s32.totalorder %s156, %s172
      %p174 = scmp.eq.s32.totalorder %s18, 0
      %p175 = por %p173, %p174
      %p176 = scmp.le.s32.totalorder 1, %s12
      %p177 = scmp.lt.s32.totalorder %s12, 4
      %p178 = pnand %p176, %p177
      %p179 = pneg %p178
      // Predicated region
      $region9: #{fuser_forward.1} parent=5 // pred_check
        _
      $region10: #{fuser_forward.1} parent=5 // pred_check_branch
        %181 = sbr.rel (%p178) target = $region12
      $region11: #{fuser_forward.1} parent=5 // pred_region
        %s182 = ssub.s32 %s12, 1
      $region12: #{fuser_forward.1} parent=5 // pred_fallthru
        _
      %p183 = scmp.lt.s32.totalorder %s12, 3
      // Predicated region
      $region13: #{fuser_forward.1} parent=5 // pred_check
        %p184 = pneg %p183
      $region14: #{fuser_forward.1} parent=5 // pred_check_branch
        %186 = sbr.rel (%p184) target = $region16
      $region15: #{fuser_forward.1} parent=5 // pred_region
        // Predicated region
        $region17: #{fuser_forward.1} parent=15 // pred_check
          %p187 = pneg %p32
        $region18: #{fuser_forward.1} parent=15 // pred_check_branch
          %189 = sbr.rel (%p187) target = $region20
        $region19: #{fuser_forward.1} parent=15 // pred_region
          %s190 = sand.u32 %s22, 1
          %s191 = sand.u32 %s22, 1
          %s192 = smul.addr %s191, 32
          %s193 = scalar_lea.vmem [#allocation2], %s192
          %s194 = smul.addr %s12, 8
          %s195 = scalar_lea.vmem %s0, %s194
          // Predicated region
          $region21: #{fuser_forward.1} parent=19 // pred_check
            _
          $region22: #{fuser_forward.1} parent=19 // pred_check_branch
            %197 = sbr.rel (0) target = $region24
          $region23: #{fuser_forward.1} parent=19 // pred_region
            // Predicated region
            $region25: #{fuser_forward.1} parent=23 // pred_check
              _
            $region26: #{fuser_forward.1} parent=23 // pred_check_branch
              %199 = sbr.rel (0) target = $region28
            $region27: #{fuser_forward.1} parent=23 // pred_region
              // Predicated region
              $region40: #{fuser_forward.1} parent=27 // pred_check
                _
              $region41: #{fuser_forward.1} parent=27 // pred_check_branch
                %220 = sbr.rel (0) target = $region43
              $region42: #{fuser_forward.1} parent=27 // pred_region
                loop: start=0, step=1, limit=1
                $region44: #{fuser_forward.1} parent=42 // loop_pre_header
                  _
                $region45: #{fuser_forward.1} parent=42 // loop_header
                  %s222 = sphi 0, %s226
                  %p223 = scmp.ge.s32.totalorder %s222, 1
                  %s227 = sphi %s195, %s195
                  %s228 = sphi %s193, %s193
                $region46: #{fuser_forward.1} parent=42 // loop_header_branch
                  %225 = sbr.rel (%p223) target = $region50
                $region47: #{fuser_forward.1} parent=42 // loop_body
                  %v229 = vld [vmem:[%s227] sm:$0xff]
                  %230 = vst [vmem:[%s228] sm:$0xff] %v229
                  %v231 = vld [vmem:[%s227 + $0x18] sm:$0xff]
                  %232 = vst [vmem:[%s228 + $0x8] sm:$0xff] %v231
                  %v233 = vld [vmem:[%s227 + $0x30] sm:$0xff]
                  %234 = vst [vmem:[%s228 + $0x10] sm:$0xff] %v233
                  %v235 = vld [vmem:[%s227 + $0x48] sm:$0xff]
                  %236 = vst [vmem:[%s228 + $0x18] sm:$0xff] %v235
                $region48: #{fuser_forward.1} parent=42 // loop_footer
                  %s226 = sadd.s32 1, %s222
                $region49: #{fuser_forward.1} parent=42 // loop_footer_branch
                  %221 = sbr.rel target = $region45
                $region50: #{fuser_forward.1} parent=42 // loop_exit
                  _
              $region43: #{fuser_forward.1} parent=27 // pred_fallthru
                _
              // Predicated region
              $region51: #{fuser_forward.1} parent=27 // pred_check
                _
              $region52: #{fuser_forward.1} parent=27 // pred_check_branch
                %238 = sbr.rel target = $region54
              $region53: #{fuser_forward.1} parent=27 // pred_region
                _
              $region54: #{fuser_forward.1} parent=27 // pred_fallthru
                _
            $region28: #{fuser_forward.1} parent=23 // pred_fallthru
              _
            // Predicated region
            $region29: #{fuser_forward.1} parent=23 // pred_check
              _
            $region30: #{fuser_forward.1} parent=23 // pred_check_branch
              %201 = sbr.rel target = $region32
            $region31: #{fuser_forward.1} parent=23 // pred_region
              loop: start=0, step=1, limit=1
              $region33: #{fuser_forward.1} parent=31 // loop_pre_header
                _
              $region34: #{fuser_forward.1} parent=31 // loop_header
                %s204 = sphi 0, %s208
                %p205 = scmp.ge.s32.totalorder %s204, 1
                %s209 = sphi %s195, %s195
                %s210 = sphi %s193, %s193
              $region35: #{fuser_forward.1} parent=31 // loop_header_branch
                %207 = sbr.rel (%p205) target = $region39
              $region36: #{fuser_forward.1} parent=31 // loop_body
                %v211 = vld [vmem:[%s209] sm:$0xff]
                %212 = vst [vmem:[%s210] sm:$0xff] %v211
                %v213 = vld [vmem:[%s209 + $0x18] sm:$0xff]
                %214 = vst [vmem:[%s210 + $0x8] sm:$0xff] %v213
                %v215 = vld [vmem:[%s209 + $0x30] sm:$0xff]
                %216 = vst [vmem:[%s210 + $0x10] sm:$0xff] %v215
                %v217 = vld [vmem:[%s209 + $0x48] sm:$0xff]
                %218 = vst [vmem:[%s210 + $0x18] sm:$0xff] %v217
              $region37: #{fuser_forward.1} parent=31 // loop_footer
                %s208 = sadd.s32 1, %s204
              $region38: #{fuser_forward.1} parent=31 // loop_footer_branch
                %203 = sbr.rel target = $region34
              $region39: #{fuser_forward.1} parent=31 // loop_exit
                _
            $region32: #{fuser_forward.1} parent=23 // pred_fallthru
              _
          $region24: #{fuser_forward.1} parent=19 // pred_fallthru
            _
          %239 = vnop
        $region20: #{fuser_forward.1} parent=15 // pred_fallthru
          _
        // Predicated region
        $region55: #{fuser_forward.1} parent=15 // pred_check
          %p240 = pneg %p58
        $region56: #{fuser_forward.1} parent=15 // pred_check_branch
          %242 = sbr.rel (%p240) target = $region58
        $region57: #{fuser_forward.1} parent=15 // pred_region
          %s243 = sand.u32 %s48, 1
          %s244 = sand.u32 %s48, 1
          %s245 = smul.addr %s244, 48
          %s246 = scalar_lea.vmem [#allocation3], %s245
          %s247 = smul.addr %s12, 8
          %s248 = scalar_lea.vmem %s1, %s247
          // Predicated region
          $region59: #{fuser_forward.1} parent=57 // pred_check
            _
          $region60: #{fuser_forward.1} parent=57 // pred_check_branch
            %250 = sbr.rel (0) target = $region62
          $region61: #{fuser_forward.1} parent=57 // pred_region
            // Predicated region
            $region63: #{fuser_forward.1} parent=61 // pred_check
              _
            $region64: #{fuser_forward.1} parent=61 // pred_check_branch
              %252 = sbr.rel (0) target = $region66
            $region65: #{fuser_forward.1} parent=61 // pred_region
              // Predicated region
              $region78: #{fuser_forward.1} parent=65 // pred_check
                _
              $region79: #{fuser_forward.1} parent=65 // pred_check_branch
                %277 = sbr.rel (0) target = $region81
              $region80: #{fuser_forward.1} parent=65 // pred_region
                loop: start=0, step=1, limit=1
                $region82: #{fuser_forward.1} parent=80 // loop_pre_header
                  _
                $region83: #{fuser_forward.1} parent=80 // loop_header
                  %s279 = sphi 0, %s283
                  %p280 = scmp.ge.s32.totalorder %s279, 1
                  %s284 = sphi %s248, %s248
                  %s285 = sphi %s246, %s246
                $region84: #{fuser_forward.1} parent=80 // loop_header_branch
                  %282 = sbr.rel (%p280) target = $region88
                $region85: #{fuser_forward.1} parent=80 // loop_body
                  %v286 = vld [vmem:[%s284] sm:$0xff]
                  %287 = vst [vmem:[%s285] sm:$0xff] %v286
                  %v288 = vld [vmem:[%s284 + $0x18] sm:$0xff]
                  %289 = vst [vmem:[%s285 + $0x8] sm:$0xff] %v288
                  %v290 = vld [vmem:[%s284 + $0x30] sm:$0xff]
                  %291 = vst [vmem:[%s285 + $0x10] sm:$0xff] %v290
                  %v292 = vld [vmem:[%s284 + $0x48] sm:$0xff]
                  %293 = vst [vmem:[%s285 + $0x18] sm:$0xff] %v292
                  %v294 = vld [vmem:[%s284 + $0x60] sm:$0xff]
                  %295 = vst [vmem:[%s285 + $0x20] sm:$0xff] %v294
                  %v296 = vld [vmem:[%s284 + $0x78] sm:$0xff]
                  %297 = vst [vmem:[%s285 + $0x28] sm:$0xff] %v296
                $region86: #{fuser_forward.1} parent=80 // loop_footer
                  %s283 = sadd.s32 1, %s279
                $region87: #{fuser_forward.1} parent=80 // loop_footer_branch
                  %278 = sbr.rel target = $region83
                $region88: #{fuser_forward.1} parent=80 // loop_exit
                  _
              $region81: #{fuser_forward.1} parent=65 // pred_fallthru
                _
              // Predicated region
              $region89: #{fuser_forward.1} parent=65 // pred_check
                _
              $region90: #{fuser_forward.1} parent=65 // pred_check_branch
                %299 = sbr.rel target = $region92
              $region91: #{fuser_forward.1} parent=65 // pred_region
                _
              $region92: #{fuser_forward.1} parent=65 // pred_fallthru
                _
            $region66: #{fuser_forward.1} parent=61 // pred_fallthru
              _
            // Predicated region
            $region67: #{fuser_forward.1} parent=61 // pred_check
              _
            $region68: #{fuser_forward.1} parent=61 // pred_check_branch
              %254 = sbr.rel target = $region70
            $region69: #{fuser_forward.1} parent=61 // pred_region
              loop: start=0, step=1, limit=1
              $region71: #{fuser_forward.1} parent=69 // loop_pre_header
                _
              $region72: #{fuser_forward.1} parent=69 // loop_header
                %s257 = sphi 0, %s261
                %p258 = scmp.ge.s32.totalorder %s257, 1
                %s262 = sphi %s248, %s248
                %s263 = sphi %s246, %s246
              $region73: #{fuser_forward.1} parent=69 // loop_header_branch
                %260 = sbr.rel (%p258) target = $region77
              $region74: #{fuser_forward.1} parent=69 // loop_body
                %v264 = vld [vmem:[%s262] sm:$0xff]
                %265 = vst [vmem:[%s263] sm:$0xff] %v264
                %v266 = vld [vmem:[%s262 + $0x18] sm:$0xff]
                %267 = vst [vmem:[%s263 + $0x8] sm:$0xff] %v266
                %v268 = vld [vmem:[%s262 + $0x30] sm:$0xff]
                %269 = vst [vmem:[%s263 + $0x10] sm:$0xff] %v268
                %v270 = vld [vmem:[%s262 + $0x48] sm:$0xff]
                %271 = vst [vmem:[%s263 + $0x18] sm:$0xff] %v270
                %v272 = vld [vmem:[%s262 + $0x60] sm:$0xff]
                %273 = vst [vmem:[%s263 + $0x20] sm:$0xff] %v272
                %v274 = vld [vmem:[%s262 + $0x78] sm:$0xff]
                %275 = vst [vmem:[%s263 + $0x28] sm:$0xff] %v274
              $region75: #{fuser_forward.1} parent=69 // loop_footer
                %s261 = sadd.s32 1, %s257
              $region76: #{fuser_forward.1} parent=69 // loop_footer_branch
                %256 = sbr.rel target = $region72
              $region77: #{fuser_forward.1} parent=69 // loop_exit
                _
            $region70: #{fuser_forward.1} parent=61 // pred_fallthru
              _
          $region62: #{fuser_forward.1} parent=57 // pred_fallthru
            _
          %300 = vnop
        $region58: #{fuser_forward.1} parent=15 // pred_fallthru
          _
        // Predicated region
        $region93: #{fuser_forward.1} parent=15 // pred_check
          %p301 = pneg %p84
        $region94: #{fuser_forward.1} parent=15 // pred_check_branch
          %303 = sbr.rel (%p301) target = $region96
        $region95: #{fuser_forward.1} parent=15 // pred_region
          %s304 = sand.u32 %s74, 1
          %s305 = sand.u32 %s74, 1
          %s306 = smul.addr %s305, 32
          %s307 = scalar_lea.vmem [#allocation4], %s306
          %s308 = smul.addr %s12, 8
          %s309 = scalar_lea.vmem %s2, %s308
          // Predicated region
          $region97: #{fuser_forward.1} parent=95 // pred_check
            _
          $region98: #{fuser_forward.1} parent=95 // pred_check_branch
            %311 = sbr.rel (0) target = $region100
          $region99: #{fuser_forward.1} parent=95 // pred_region
            // Predicated region
            $region101: #{fuser_forward.1} parent=99 // pred_check
              _
            $region102: #{fuser_forward.1} parent=99 // pred_check_branch
              %313 = sbr.rel (0) target = $region104
            $region103: #{fuser_forward.1} parent=99 // pred_region
              // Predicated region
              $region116: #{fuser_forward.1} parent=103 // pred_check
                _
              $region117: #{fuser_forward.1} parent=103 // pred_check_branch
                %334 = sbr.rel (0) target = $region119
              $region118: #{fuser_forward.1} parent=103 // pred_region
                loop: start=0, step=1, limit=1
                $region120: #{fuser_forward.1} parent=118 // loop_pre_header
                  _
                $region121: #{fuser_forward.1} parent=118 // loop_header
                  %s336 = sphi 0, %s340
                  %p337 = scmp.ge.s32.totalorder %s336, 1
                  %s341 = sphi %s309, %s309
                  %s342 = sphi %s307, %s307
                $region122: #{fuser_forward.1} parent=118 // loop_header_branch
                  %339 = sbr.rel (%p337) target = $region126
                $region123: #{fuser_forward.1} parent=118 // loop_body
                  %v343 = vld [vmem:[%s341] sm:$0xff]
                  %344 = vst [vmem:[%s342] sm:$0xff] %v343
                  %v345 = vld [vmem:[%s341 + $0x18] sm:$0xff]
                  %346 = vst [vmem:[%s342 + $0x8] sm:$0xff] %v345
                  %v347 = vld [vmem:[%s341 + $0x30] sm:$0xff]
                  %348 = vst [vmem:[%s342 + $0x10] sm:$0xff] %v347
                  %v349 = vld [vmem:[%s341 + $0x48] sm:$0xff]
                  %350 = vst [vmem:[%s342 + $0x18] sm:$0xff] %v349
                $region124: #{fuser_forward.1} parent=118 // loop_footer
                  %s340 = sadd.s32 1, %s336
                $region125: #{fuser_forward.1} parent=118 // loop_footer_branch
                  %335 = sbr.rel target = $region121
                $region126: #{fuser_forward.1} parent=118 // loop_exit
                  _
              $region119: #{fuser_forward.1} parent=103 // pred_fallthru
                _
              // Predicated region
              $region127: #{fuser_forward.1} parent=103 // pred_check
                _
              $region128: #{fuser_forward.1} parent=103 // pred_check_branch
                %352 = sbr.rel target = $region130
              $region129: #{fuser_forward.1} parent=103 // pred_region
                _
              $region130: #{fuser_forward.1} parent=103 // pred_fallthru
                _
            $region104: #{fuser_forward.1} parent=99 // pred_fallthru
              _
            // Predicated region
            $region105: #{fuser_forward.1} parent=99 // pred_check
              _
            $region106: #{fuser_forward.1} parent=99 // pred_check_branch
              %315 = sbr.rel target = $region108
            $region107: #{fuser_forward.1} parent=99 // pred_region
              loop: start=0, step=1, limit=1
              $region109: #{fuser_forward.1} parent=107 // loop_pre_header
                _
              $region110: #{fuser_forward.1} parent=107 // loop_header
                %s318 = sphi 0, %s322
                %p319 = scmp.ge.s32.totalorder %s318, 1
                %s323 = sphi %s309, %s309
                %s324 = sphi %s307, %s307
              $region111: #{fuser_forward.1} parent=107 // loop_header_branch
                %321 = sbr.rel (%p319) target = $region115
              $region112: #{fuser_forward.1} parent=107 // loop_body
                %v325 = vld [vmem:[%s323] sm:$0xff]
                %326 = vst [vmem:[%s324] sm:$0xff] %v325
                %v327 = vld [vmem:[%s323 + $0x18] sm:$0xff]
                %328 = vst [vmem:[%s324 + $0x8] sm:$0xff] %v327
                %v329 = vld [vmem:[%s323 + $0x30] sm:$0xff]
                %330 = vst [vmem:[%s324 + $0x10] sm:$0xff] %v329
                %v331 = vld [vmem:[%s323 + $0x48] sm:$0xff]
                %332 = vst [vmem:[%s324 + $0x18] sm:$0xff] %v331
              $region113: #{fuser_forward.1} parent=107 // loop_footer
                %s322 = sadd.s32 1, %s318
              $region114: #{fuser_forward.1} parent=107 // loop_footer_branch
                %317 = sbr.rel target = $region110
              $region115: #{fuser_forward.1} parent=107 // loop_exit
                _
            $region108: #{fuser_forward.1} parent=99 // pred_fallthru
              _
          $region100: #{fuser_forward.1} parent=95 // pred_fallthru
            _
          %353 = vnop
        $region96: #{fuser_forward.1} parent=15 // pred_fallthru
          _
        // Predicated region
        $region131: #{fuser_forward.1} parent=15 // pred_check
          %p354 = pneg %p110
        $region132: #{fuser_forward.1} parent=15 // pred_check_branch
          %356 = sbr.rel (%p354) target = $region134
        $region133: #{fuser_forward.1} parent=15 // pred_region
          %s357 = sand.u32 %s100, 1
          %s358 = sand.u32 %s100, 1
          %s359 = smul.addr %s358, 48
          %s360 = scalar_lea.vmem [#allocation5], %s359
          %s361 = smul.addr %s12, 8
          %s362 = scalar_lea.vmem %s3, %s361
          // Predicated region
          $region135: #{fuser_forward.1} parent=133 // pred_check
            _
          $region136: #{fuser_forward.1} parent=133 // pred_check_branch
            %364 = sbr.rel (0) target = $region138
          $region137: #{fuser_forward.1} parent=133 // pred_region
            // Predicated region
            $region139: #{fuser_forward.1} parent=137 // pred_check
              _
            $region140: #{fuser_forward.1} parent=137 // pred_check_branch
              %366 = sbr.rel (0) target = $region142
            $region141: #{fuser_forward.1} parent=137 // pred_region
              // Predicated region
              $region154: #{fuser_forward.1} parent=141 // pred_check
                _
              $region155: #{fuser_forward.1} parent=141 // pred_check_branch
                %391 = sbr.rel (0) target = $region157
              $region156: #{fuser_forward.1} parent=141 // pred_region
                loop: start=0, step=1, limit=1
                $region158: #{fuser_forward.1} parent=156 // loop_pre_header
                  _
                $region159: #{fuser_forward.1} parent=156 // loop_header
                  %s393 = sphi 0, %s397
                  %p394 = scmp.ge.s32.totalorder %s393, 1
                  %s398 = sphi %s362, %s362
                  %s399 = sphi %s360, %s360
                $region160: #{fuser_forward.1} parent=156 // loop_header_branch
                  %396 = sbr.rel (%p394) target = $region164
                $region161: #{fuser_forward.1} parent=156 // loop_body
                  %v400 = vld [vmem:[%s398] sm:$0xff]
                  %401 = vst [vmem:[%s399] sm:$0xff] %v400
                  %v402 = vld [vmem:[%s398 + $0x18] sm:$0xff]
                  %403 = vst [vmem:[%s399 + $0x8] sm:$0xff] %v402
                  %v404 = vld [vmem:[%s398 + $0x30] sm:$0xff]
                  %405 = vst [vmem:[%s399 + $0x10] sm:$0xff] %v404
                  %v406 = vld [vmem:[%s398 + $0x48] sm:$0xff]
                  %407 = vst [vmem:[%s399 + $0x18] sm:$0xff] %v406
                  %v408 = vld [vmem:[%s398 + $0x60] sm:$0xff]
                  %409 = vst [vmem:[%s399 + $0x20] sm:$0xff] %v408
                  %v410 = vld [vmem:[%s398 + $0x78] sm:$0xff]
                  %411 = vst [vmem:[%s399 + $0x28] sm:$0xff] %v410
                $region162: #{fuser_forward.1} parent=156 // loop_footer
                  %s397 = sadd.s32 1, %s393
                $region163: #{fuser_forward.1} parent=156 // loop_footer_branch
                  %392 = sbr.rel target = $region159
                $region164: #{fuser_forward.1} parent=156 // loop_exit
                  _
              $region157: #{fuser_forward.1} parent=141 // pred_fallthru
                _
              // Predicated region
              $region165: #{fuser_forward.1} parent=141 // pred_check
                _
              $region166: #{fuser_forward.1} parent=141 // pred_check_branch
                %413 = sbr.rel target = $region168
              $region167: #{fuser_forward.1} parent=141 // pred_region
                _
              $region168: #{fuser_forward.1} parent=141 // pred_fallthru
                _
            $region142: #{fuser_forward.1} parent=137 // pred_fallthru
              _
            // Predicated region
            $region143: #{fuser_forward.1} parent=137 // pred_check
              _
            $region144: #{fuser_forward.1} parent=137 // pred_check_branch
              %368 = sbr.rel target = $region146
            $region145: #{fuser_forward.1} parent=137 // pred_region
              loop: start=0, step=1, limit=1
              $region147: #{fuser_forward.1} parent=145 // loop_pre_header
                _
              $region148: #{fuser_forward.1} parent=145 // loop_header
                %s371 = sphi 0, %s375
                %p372 = scmp.ge.s32.totalorder %s371, 1
                %s376 = sphi %s362, %s362
                %s377 = sphi %s360, %s360
              $region149: #{fuser_forward.1} parent=145 // loop_header_branch
                %374 = sbr.rel (%p372) target = $region153
              $region150: #{fuser_forward.1} parent=145 // loop_body
                %v378 = vld [vmem:[%s376] sm:$0xff]
                %379 = vst [vmem:[%s377] sm:$0xff] %v378
                %v380 = vld [vmem:[%s376 + $0x18] sm:$0xff]
                %381 = vst [vmem:[%s377 + $0x8] sm:$0xff] %v380
                %v382 = vld [vmem:[%s376 + $0x30] sm:$0xff]
                %383 = vst [vmem:[%s377 + $0x10] sm:$0xff] %v382
                %v384 = vld [vmem:[%s376 + $0x48] sm:$0xff]
                %385 = vst [vmem:[%s377 + $0x18] sm:$0xff] %v384
                %v386 = vld [vmem:[%s376 + $0x60] sm:$0xff]
                %387 = vst [vmem:[%s377 + $0x20] sm:$0xff] %v386
                %v388 = vld [vmem:[%s376 + $0x78] sm:$0xff]
                %389 = vst [vmem:[%s377 + $0x28] sm:$0xff] %v388
              $region151: #{fuser_forward.1} parent=145 // loop_footer
                %s375 = sadd.s32 1, %s371
              $region152: #{fuser_forward.1} parent=145 // loop_footer_branch
                %370 = sbr.rel target = $region148
              $region153: #{fuser_forward.1} parent=145 // loop_exit
                _
            $region146: #{fuser_forward.1} parent=137 // pred_fallthru
              _
          $region138: #{fuser_forward.1} parent=133 // pred_fallthru
            _
          %414 = vnop
        $region134: #{fuser_forward.1} parent=15 // pred_fallthru
          _
      $region16: #{fuser_forward.1} parent=5 // pred_fallthru
        _
      %p415 = scmp.le.s32.totalorder 1, %s12
      %p416 = scmp.lt.s32.totalorder %s12, 4
      %p417 = pnand %p415, %p416
      %p418 = pneg %p417
      // Predicated region
      $region169: #{fuser_forward.1} parent=5 // pred_check
        _
      $region170: #{fuser_forward.1} parent=5 // pred_check_branch
        %420 = sbr.rel (%p417) target = $region172
      $region171: #{fuser_forward.1} parent=5 // pred_region
        %s421 = ssub.s32 %s12, 1
        %s422 = sand.u32 %s25, 1
        %s423 = sand.u32 %s25, 1
        %s424 = smul.addr %s423, 32
        %s425 = scalar_lea.vmem [#allocation2], %s424
        // Predicated region
        $region173: #{fuser_forward.1} parent=171 // pred_check
          %p426 = pneg %p38
        $region174: #{fuser_forward.1} parent=171 // pred_check_branch
          %428 = sbr.rel (%p426) target = $region176
        $region175: #{fuser_forward.1} parent=171 // pred_region
          _
        $region176: #{fuser_forward.1} parent=171 // pred_fallthru
          _
        %s429 = sand.u32 %s51, 1
        %s430 = sand.u32 %s51, 1
        %s431 = smul.addr %s430, 48
        %s432 = scalar_lea.vmem [#allocation3], %s431
        // Predicated region
        $region177: #{fuser_forward.1} parent=171 // pred_check
          %p433 = pneg %p64
        $region178: #{fuser_forward.1} parent=171 // pred_check_branch
          %435 = sbr.rel (%p433) target = $region180
        $region179: #{fuser_forward.1} parent=171 // pred_region
          _
        $region180: #{fuser_forward.1} parent=171 // pred_fallthru
          _
        %s436 = sand.u32 %s77, 1
        %s437 = sand.u32 %s77, 1
        %s438 = smul.addr %s437, 32
        %s439 = scalar_lea.vmem [#allocation4], %s438
        // Predicated region
        $region181: #{fuser_forward.1} parent=171 // pred_check
          %p440 = pneg %p90
        $region182: #{fuser_forward.1} parent=171 // pred_check_branch
          %442 = sbr.rel (%p440) target = $region184
        $region183: #{fuser_forward.1} parent=171 // pred_region
          _
        $region184: #{fuser_forward.1} parent=171 // pred_fallthru
          _
        %s443 = sand.u32 %s103, 1
        %s444 = sand.u32 %s103, 1
        %s445 = smul.addr %s444, 48
        %s446 = scalar_lea.vmem [#allocation5], %s445
        // Predicated region
        $region185: #{fuser_forward.1} parent=171 // pred_check
          %p447 = pneg %p116
        $region186: #{fuser_forward.1} parent=171 // pred_check_branch
          %449 = sbr.rel (%p447) target = $region188
        $region187: #{fuser_forward.1} parent=171 // pred_region
          _
        $region188: #{fuser_forward.1} parent=171 // pred_fallthru
          _
        %s450 = sand.u32 %s25, 1
        %s451 = sand.u32 %s25, 1
        %s452 = smul.addr %s451, 32
        %s453 = scalar_lea.vmem [#allocation2], %s452
        %p454 = pneg %p38
        %p455 = pneg %p35
        %s456 = sand.u32 %s51, 1
        %s457 = sand.u32 %s51, 1
        %s458 = smul.addr %s457, 48
        %s459 = scalar_lea.vmem [#allocation3], %s458
        %p460 = pneg %p64
        %p461 = pneg %p61
        %s462 = sand.u32 %s77, 1
        %s463 = sand.u32 %s77, 1
        %s464 = smul.addr %s463, 32
        %s465 = scalar_lea.vmem [#allocation4], %s464
        %p466 = pneg %p90
        %p467 = pneg %p87
        %s468 = sand.u32 %s103, 1
        %s469 = sand.u32 %s103, 1
        %s470 = smul.addr %s469, 48
        %s471 = scalar_lea.vmem [#allocation5], %s470
        %p472 = pneg %p116
        %p473 = pneg %p113
        %p474 = pneg %p142
        %p475 = pneg %p139
        %s476 = sand.u32 %s129, 1
        %s477 = sand.u32 %s129, 1
        %s478 = smul.addr %s477, 48
        %s479 = scalar_lea.vmem [#allocation6], %s478
        %p480 = pneg %p168
        %p481 = pneg %p165
        %s482 = sand.u32 %s155, 1
        %s483 = sand.u32 %s155, 1
        %s484 = smul.addr %s483, 96
        %s485 = scalar_lea.vmem [#allocation7], %s484
        %v486 = vld [vmem:[%s425] sm:$0xff]
        %v487 = vld [vmem:[%s425 + $0x8] sm:$0xff]
        %v488 = vld [vmem:[%s425 + $0x10] sm:$0xff]
        %v489 = vld [vmem:[%s425 + $0x18] sm:$0xff]
        %v490 = vld [vmem:[%s439] sm:$0xff]
        %v491 = vld [vmem:[%s439 + $0x8] sm:$0xff]
        %v492 = vld [vmem:[%s439 + $0x10] sm:$0xff]
        %v493 = vld [vmem:[%s439 + $0x18] sm:$0xff]
        %v494 = vmul.f32 %v486, %v490
        %v495 = vmul.f32 %v487, %v491
        %v496 = vmul.f32 %v488, %v492
        %v497 = vmul.f32 %v489, %v493
        %498 = vst [vmem:[%s479] sm:$0xff] %v494
        %499 = vst [vmem:[%s479 + $0x8] sm:$0xff] %v495
        %500 = vst [vmem:[%s479 + $0x10] sm:$0xff] %v496
        %501 = vst [vmem:[%s479 + $0x18] sm:$0xff] %v497
        %v502 = vld [vmem:[%s432] sm:$0xff]
        %v503 = vld [vmem:[%s432 + $0x8] sm:$0xff]
        %v504 = vld [vmem:[%s432 + $0x10] sm:$0xff]
        %v505 = vld [vmem:[%s432 + $0x18] sm:$0xff]
        %v506 = vld [vmem:[%s432 + $0x20] sm:$0xff]
        %v507 = vld [vmem:[%s432 + $0x28] sm:$0xff]
        %v508 = vld [vmem:[%s446] sm:$0xff]
        %v509 = vld [vmem:[%s446 + $0x8] sm:$0xff]
        %v510 = vld [vmem:[%s446 + $0x10] sm:$0xff]
        %v511 = vld [vmem:[%s446 + $0x18] sm:$0xff]
        %v512 = vld [vmem:[%s446 + $0x20] sm:$0xff]
        %v513 = vld [vmem:[%s446 + $0x28] sm:$0xff]
        %v514 = vmul.f32 %v502, %v508
        %v515 = vmul.f32 %v503, %v509
        %v516 = vmul.f32 %v504, %v510
        %v517 = vmul.f32 %v505, %v511
        %v518 = vadd.f32 %v514, %v516
        %v519 = vadd.f32 %v515, %v517
        %v520 = vmul.f32 %v506, %v512
        %v521 = vmul.f32 %v507, %v513
        %v522 = vadd.f32 %v518, %v520
        %v523 = vadd.f32 %v519, %v521
        %524 = vst [vmem:[%s479 + $0x20] sm:$0xff] %v522
        %525 = vst [vmem:[%s479 + $0x28] sm:$0xff] %v523
        %v526 = vadd.f32 %v502, %v508
        %v527 = vadd.f32 %v503, %v509
        %v528 = vmul.f32 %v526, 0.5
        %v529 = vmul.f32 %v527, 0.5
        %530 = vst [vmem:[%s485] sm:$0xff] %v528
        %531 = vst [vmem:[%s485 + $0x8] sm:$0xff] %v529
        %v532 = vadd.f32 %v504, %v510
        %v533 = vadd.f32 %v505, %v511
        %v534 = vmul.f32 %v532, 0.5
        %v535 = vmul.f32 %v533, 0.5
        %536 = vst [vmem:[%s485 + $0x10] sm:$0xff] %v534
        %537 = vst [vmem:[%s485 + $0x18] sm:$0xff] %v535
        %v538 = vadd.f32 %v506, %v512
        %v539 = vadd.f32 %v507, %v513
        %v540 = vmul.f32 %v538, 0.5
        %v541 = vmul.f32 %v539, 0.5
        %542 = vst [vmem:[%s485 + $0x20] sm:$0xff] %v540
        %543 = vst [vmem:[%s485 + $0x28] sm:$0xff] %v541
        %v544 = vmul.f32 %v504, %v512
        %v545 = vmul.f32 %v505, %v513
        %v546 = vmul.f32 %v506, %v510
        %v547 = vmul.f32 %v507, %v511
        %v548 = vsub.f32 %v544, %v546
        %v549 = vsub.f32 %v545, %v547
        %550 = vst [vmem:[%s485 + $0x30] sm:$0xff] %v548
        %551 = vst [vmem:[%s485 + $0x38] sm:$0xff] %v549
        %v552 = vmul.f32 %v506, %v508
        %v553 = vmul.f32 %v507, %v509
        %v554 = vmul.f32 %v502, %v512
        %v555 = vmul.f32 %v503, %v513
        %v556 = vsub.f32 %v552, %v554
        %v557 = vsub.f32 %v553, %v555
        %558 = vst [vmem:[%s485 + $0x40] sm:$0xff] %v556
        %559 = vst [vmem:[%s485 + $0x48] sm:$0xff] %v557
        %v560 = vmul.f32 %v502, %v510
        %v561 = vmul.f32 %v503, %v511
        %v562 = vmul.f32 %v504, %v508
        %v563 = vmul.f32 %v505, %v509
        %v564 = vsub.f32 %v560, %v562
        %v565 = vsub.f32 %v561, %v563
        %566 = vst [vmem:[%s485 + $0x50] sm:$0xff] %v564
        %567 = vst [vmem:[%s485 + $0x58] sm:$0xff] %v565
        %s568 = sand.u32 %s129, 1
        %s569 = sand.u32 %s129, 1
        %s570 = smul.addr %s569, 48
        %s571 = scalar_lea.vmem [#allocation6], %s570
        %s572 = sand.u32 %s155, 1
        %s573 = sand.u32 %s155, 1
        %s574 = smul.addr %s573, 96
        %s575 = scalar_lea.vmem [#allocation7], %s574
        // Predicated region
        $region189: #{fuser_forward.1} parent=171 // pred_check
          %p576 = pneg %p139
        $region190: #{fuser_forward.1} parent=171 // pred_check_branch
          %578 = sbr.rel (%p576) target = $region192
        $region191: #{fuser_forward.1} parent=171 // pred_region
          %s579 = smul.addr %s17, 8
          %s580 = scalar_lea.vmem %s4, %s579
          // Predicated region
          $region193: #{fuser_forward.1} parent=191 // pred_check
            _
          $region194: #{fuser_forward.1} parent=191 // pred_check_branch
            %582 = sbr.rel (0) target = $region196
          $region195: #{fuser_forward.1} parent=191 // pred_region
            // Predicated region
            $region197: #{fuser_forward.1} parent=195 // pred_check
              _
            $region198: #{fuser_forward.1} parent=195 // pred_check_branch
              %584 = sbr.rel (0) target = $region200
            $region199: #{fuser_forward.1} parent=195 // pred_region
              // Predicated region
              $region212: #{fuser_forward.1} parent=199 // pred_check
                _
              $region213: #{fuser_forward.1} parent=199 // pred_check_branch
                %609 = sbr.rel (0) target = $region215
              $region214: #{fuser_forward.1} parent=199 // pred_region
                loop: start=0, step=1, limit=1
                $region216: #{fuser_forward.1} parent=214 // loop_pre_header
                  _
                $region217: #{fuser_forward.1} parent=214 // loop_header
                  %s611 = sphi 0, %s615
                  %p612 = scmp.ge.s32.totalorder %s611, 1
                  %s616 = sphi %s571, %s571
                  %s617 = sphi %s580, %s580
                $region218: #{fuser_forward.1} parent=214 // loop_header_branch
                  %614 = sbr.rel (%p612) target = $region222
                $region219: #{fuser_forward.1} parent=214 // loop_body
                  %v618 = vld [vmem:[%s616] sm:$0xff]
                  %619 = vst [vmem:[%s617] sm:$0xff] %v618
                  %v620 = vld [vmem:[%s616 + $0x8] sm:$0xff]
                  %621 = vst [vmem:[%s617 + $0x18] sm:$0xff] %v620
                  %v622 = vld [vmem:[%s616 + $0x10] sm:$0xff]
                  %623 = vst [vmem:[%s617 + $0x30] sm:$0xff] %v622
                  %v624 = vld [vmem:[%s616 + $0x18] sm:$0xff]
                  %625 = vst [vmem:[%s617 + $0x48] sm:$0xff] %v624
                  %v626 = vld [vmem:[%s616 + $0x20] sm:$0xff]
                  %627 = vst [vmem:[%s617 + $0x60] sm:$0xff] %v626
                  %v628 = vld [vmem:[%s616 + $0x28] sm:$0xff]
                  %629 = vst [vmem:[%s617 + $0x78] sm:$0xff] %v628
                $region220: #{fuser_forward.1} parent=214 // loop_footer
                  %s615 = sadd.s32 1, %s611
                $region221: #{fuser_forward.1} parent=214 // loop_footer_branch
                  %610 = sbr.rel target = $region217
                $region222: #{fuser_forward.1} parent=214 // loop_exit
                  _
              $region215: #{fuser_forward.1} parent=199 // pred_fallthru
                _
              // Predicated region
              $region223: #{fuser_forward.1} parent=199 // pred_check
                _
              $region224: #{fuser_forward.1} parent=199 // pred_check_branch
                %631 = sbr.rel target = $region226
              $region225: #{fuser_forward.1} parent=199 // pred_region
                _
              $region226: #{fuser_forward.1} parent=199 // pred_fallthru
                _
            $region200: #{fuser_forward.1} parent=195 // pred_fallthru
              _
            // Predicated region
            $region201: #{fuser_forward.1} parent=195 // pred_check
              _
            $region202: #{fuser_forward.1} parent=195 // pred_check_branch
              %586 = sbr.rel target = $region204
            $region203: #{fuser_forward.1} parent=195 // pred_region
              loop: start=0, step=1, limit=1
              $region205: #{fuser_forward.1} parent=203 // loop_pre_header
                _
              $region206: #{fuser_forward.1} parent=203 // loop_header
                %s589 = sphi 0, %s593
                %p590 = scmp.ge.s32.totalorder %s589, 1
                %s594 = sphi %s571, %s571
                %s595 = sphi %s580, %s580
              $region207: #{fuser_forward.1} parent=203 // loop_header_branch
                %592 = sbr.rel (%p590) target = $region211
              $region208: #{fuser_forward.1} parent=203 // loop_body
                %v596 = vld [vmem:[%s594] sm:$0xff]
                %597 = vst [vmem:[%s595] sm:$0xff] %v596
                %v598 = vld [vmem:[%s594 + $0x8] sm:$0xff]
                %599 = vst [vmem:[%s595 + $0x18] sm:$0xff] %v598
                %v600 = vld [vmem:[%s594 + $0x10] sm:$0xff]
                %601 = vst [vmem:[%s595 + $0x30] sm:$0xff] %v600
                %v602 = vld [vmem:[%s594 + $0x18] sm:$0xff]
                %603 = vst [vmem:[%s595 + $0x48] sm:$0xff] %v602
                %v604 = vld [vmem:[%s594 + $0x20] sm:$0xff]
                %605 = vst [vmem:[%s595 + $0x60] sm:$0xff] %v604
                %v606 = vld [vmem:[%s594 + $0x28] sm:$0xff]
                %607 = vst [vmem:[%s595 + $0x78] sm:$0xff] %v606
              $region209: #{fuser_forward.1} parent=203 // loop_footer
                %s593 = sadd.s32 1, %s589
              $region210: #{fuser_forward.1} parent=203 // loop_footer_branch
                %588 = sbr.rel target = $region206
              $region211: #{fuser_forward.1} parent=203 // loop_exit
                _
            $region204: #{fuser_forward.1} parent=195 // pred_fallthru
              _
          $region196: #{fuser_forward.1} parent=191 // pred_fallthru
            _
          %632 = vnop
        $region192: #{fuser_forward.1} parent=171 // pred_fallthru
          _
        // Predicated region
        $region227: #{fuser_forward.1} parent=171 // pred_check
          %p633 = pneg %p165
        $region228: #{fuser_forward.1} parent=171 // pred_check_branch
          %635 = sbr.rel (%p633) target = $region230
        $region229: #{fuser_forward.1} parent=171 // pred_region
          %s636 = smul.addr %s17, 8
          %s637 = scalar_lea.vmem %s5, %s636
          // Predicated region
          $region231: #{fuser_forward.1} parent=229 // pred_check
            _
          $region232: #{fuser_forward.1} parent=229 // pred_check_branch
            %639 = sbr.rel (0) target = $region234
          $region233: #{fuser_forward.1} parent=229 // pred_region
            // Predicated region
            $region235: #{fuser_forward.1} parent=233 // pred_check
              _
            $region236: #{fuser_forward.1} parent=233 // pred_check_branch
              %641 = sbr.rel (0) target = $region238
            $region237: #{fuser_forward.1} parent=233 // pred_region
              // Predicated region
              $region250: #{fuser_forward.1} parent=237 // pred_check
                _
              $region251: #{fuser_forward.1} parent=237 // pred_check_branch
                %678 = sbr.rel (0) target = $region253
              $region252: #{fuser_forward.1} parent=237 // pred_region
                loop: start=0, step=1, limit=1
                $region254: #{fuser_forward.1} parent=252 // loop_pre_header
                  _
                $region255: #{fuser_forward.1} parent=252 // loop_header
                  %s680 = sphi 0, %s684
                  %p681 = scmp.ge.s32.totalorder %s680, 1
                  %s685 = sphi %s575, %s575
                  %s686 = sphi %s637, %s637
                $region256: #{fuser_forward.1} parent=252 // loop_header_branch
                  %683 = sbr.rel (%p681) target = $region260
                $region257: #{fuser_forward.1} parent=252 // loop_body
                  %v687 = vld [vmem:[%s685] sm:$0xff]
                  %688 = vst [vmem:[%s686] sm:$0xff] %v687
                  %v689 = vld [vmem:[%s685 + $0x8] sm:$0xff]
                  %690 = vst [vmem:[%s686 + $0x18] sm:$0xff] %v689
                  %v691 = vld [vmem:[%s685 + $0x10] sm:$0xff]
                  %692 = vst [vmem:[%s686 + $0x30] sm:$0xff] %v691
                  %v693 = vld [vmem:[%s685 + $0x18] sm:$0xff]
                  %694 = vst [vmem:[%s686 + $0x48] sm:$0xff] %v693
                  %v695 = vld [vmem:[%s685 + $0x20] sm:$0xff]
                  %696 = vst [vmem:[%s686 + $0x60] sm:$0xff] %v695
                  %v697 = vld [vmem:[%s685 + $0x28] sm:$0xff]
                  %698 = vst [vmem:[%s686 + $0x78] sm:$0xff] %v697
                  %v699 = vld [vmem:[%s685 + $0x30] sm:$0xff]
                  %700 = vst [vmem:[%s686 + $0x90] sm:$0xff] %v699
                  %v701 = vld [vmem:[%s685 + $0x38] sm:$0xff]
                  %702 = vst [vmem:[%s686 + $0xa8] sm:$0xff] %v701
                  %v703 = vld [vmem:[%s685 + $0x40] sm:$0xff]
                  %704 = vst [vmem:[%s686 + $0xc0] sm:$0xff] %v703
                  %v705 = vld [vmem:[%s685 + $0x48] sm:$0xff]
                  %706 = vst [vmem:[%s686 + $0xd8] sm:$0xff] %v705
                  %v707 = vld [vmem:[%s685 + $0x50] sm:$0xff]
                  %708 = vst [vmem:[%s686 + $0xf0] sm:$0xff] %v707
                  %v709 = vld [vmem:[%s685 + $0x58] sm:$0xff]
                  %710 = vst [vmem:[%s686 + $0x108] sm:$0xff] %v709
                $region258: #{fuser_forward.1} parent=252 // loop_footer
                  %s684 = sadd.s32 1, %s680
                $region259: #{fuser_forward.1} parent=252 // loop_footer_branch
                  %679 = sbr.rel target = $region255
                $region260: #{fuser_forward.1} parent=252 // loop_exit
                  _
              $region253: #{fuser_forward.1} parent=237 // pred_fallthru
                _
              // Predicated region
              $region261: #{fuser_forward.1} parent=237 // pred_check
                _
              $region262: #{fuser_forward.1} parent=237 // pred_check_branch
                %712 = sbr.rel target = $region264
              $region263: #{fuser_forward.1} parent=237 // pred_region
                _
              $region264: #{fuser_forward.1} parent=237 // pred_fallthru
                _
            $region238: #{fuser_forward.1} parent=233 // pred_fallthru
              _
            // Predicated region
            $region239: #{fuser_forward.1} parent=233 // pred_check
              _
            $region240: #{fuser_forward.1} parent=233 // pred_check_branch
              %643 = sbr.rel target = $region242
            $region241: #{fuser_forward.1} parent=233 // pred_region
              loop: start=0, step=1, limit=1
              $region243: #{fuser_forward.1} parent=241 // loop_pre_header
                _
              $region244: #{fuser_forward.1} parent=241 // loop_header
                %s646 = sphi 0, %s650
                %p647 = scmp.ge.s32.totalorder %s646, 1
                %s651 = sphi %s575, %s575
                %s652 = sphi %s637, %s637
              $region245: #{fuser_forward.1} parent=241 // loop_header_branch
                %649 = sbr.rel (%p647) target = $region249
              $region246: #{fuser_forward.1} parent=241 // loop_body
                %v653 = vld [vmem:[%s651] sm:$0xff]
                %654 = vst [vmem:[%s652] sm:$0xff] %v653
                %v655 = vld [vmem:[%s651 + $0x8] sm:$0xff]
                %656 = vst [vmem:[%s652 + $0x18] sm:$0xff] %v655
                %v657 = vld [vmem:[%s651 + $0x10] sm:$0xff]
                %658 = vst [vmem:[%s652 + $0x30] sm:$0xff] %v657
                %v659 = vld [vmem:[%s651 + $0x18] sm:$0xff]
                %660 = vst [vmem:[%s652 + $0x48] sm:$0xff] %v659
                %v661 = vld [vmem:[%s651 + $0x20] sm:$0xff]
                %662 = vst [vmem:[%s652 + $0x60] sm:$0xff] %v661
                %v663 = vld [vmem:[%s651 + $0x28] sm:$0xff]
                %664 = vst [vmem:[%s652 + $0x78] sm:$0xff] %v663
                %v665 = vld [vmem:[%s651 + $0x30] sm:$0xff]
                %666 = vst [vmem:[%s652 + $0x90] sm:$0xff] %v665
                %v667 = vld [vmem:[%s651 + $0x38] sm:$0xff]
                %668 = vst [vmem:[%s652 + $0xa8] sm:$0xff] %v667
                %v669 = vld [vmem:[%s651 + $0x40] sm:$0xff]
                %670 = vst [vmem:[%s652 + $0xc0] sm:$0xff] %v669
                %v671 = vld [vmem:[%s651 + $0x48] sm:$0xff]
                %672 = vst [vmem:[%s652 + $0xd8] sm:$0xff] %v671
                %v673 = vld [vmem:[%s651 + $0x50] sm:$0xff]
                %674 = vst [vmem:[%s652 + $0xf0] sm:$0xff] %v673
                %v675 = vld [vmem:[%s651 + $0x58] sm:$0xff]
                %676 = vst [vmem:[%s652 + $0x108] sm:$0xff] %v675
              $region247: #{fuser_forward.1} parent=241 // loop_footer
                %s650 = sadd.s32 1, %s646
              $region248: #{fuser_forward.1} parent=241 // loop_footer_branch
                %645 = sbr.rel target = $region244
              $region249: #{fuser_forward.1} parent=241 // loop_exit
                _
            $region242: #{fuser_forward.1} parent=233 // pred_fallthru
              _
          $region234: #{fuser_forward.1} parent=229 // pred_fallthru
            _
          %713 = vnop
        $region230: #{fuser_forward.1} parent=171 // pred_fallthru
          _
      $region172: #{fuser_forward.1} parent=5 // pred_fallthru
        _
      %p714 = scmp.le.s32.totalorder 2, %s12
      // Predicated region
      $region265: #{fuser_forward.1} parent=5 // pred_check
        %p715 = pneg %p714
      $region266: #{fuser_forward.1} parent=5 // pred_check_branch
        %717 = sbr.rel (%p715) target = $region268
      $region267: #{fuser_forward.1} parent=5 // pred_region
        %s718 = ssub.s32 %s12, 2
        // Predicated region
        $region269: #{fuser_forward.1} parent=267 // pred_check
          %p719 = pneg %p145
        $region270: #{fuser_forward.1} parent=267 // pred_check_branch
          %721 = sbr.rel (%p719) target = $region272
        $region271: #{fuser_forward.1} parent=267 // pred_region
          %s722 = sand.u32 %s130, 1
          %s723 = sand.u32 %s130, 1
          %s724 = smul.addr %s723, 48
          %s725 = scalar_lea.vmem [#allocation6], %s724
        $region272: #{fuser_forward.1} parent=267 // pred_fallthru
          _
        // Predicated region
        $region273: #{fuser_forward.1} parent=267 // pred_check
          %p726 = pneg %p171
        $region274: #{fuser_forward.1} parent=267 // pred_check_branch
          %728 = sbr.rel (%p726) target = $region276
        $region275: #{fuser_forward.1} parent=267 // pred_region
          %s729 = sand.u32 %s156, 1
          %s730 = sand.u32 %s156, 1
          %s731 = smul.addr %s730, 96
          %s732 = scalar_lea.vmem [#allocation7], %s731
        $region276: #{fuser_forward.1} parent=267 // pred_fallthru
          _
      $region268: #{fuser_forward.1} parent=5 // pred_fallthru
        _
    $region6: #{fuser_forward.1} parent=1 // loop_footer
      %s16 = sadd.s32 1, %s12
    $region7: #{fuser_forward.1} parent=1 // loop_footer_branch
      %11 = sbr.rel target = $region3
    $region8: #{fuser_forward.1} parent=1 // loop_exit
      _

</llo_original>
